<compile_context>
chip_gen: v6e
topology: v6e:2x2x1
jax: 0.10.0
libtpu: 0.0.40
codegen_flags: <defaults>
</compile_context>

<pallas_src>
import functools

import jax
import jax.numpy as jnp
from jax.experimental import pallas as pl
from jax.experimental.pallas import tpu as pltpu


# --------------------------------------------------------------------------
# Fused Pallas kernel: per batch element, run every ConvBlock back to back,
# keeping inter-layer activations in VMEM scratch.
# --------------------------------------------------------------------------
def _make_fused_kernel(num_layers, K, H, p):
    def kernel(*refs):
        # refs = [x, (band_0, bias_0), ..., (band_{L-1}, bias_{L-1}), out,
        #         pad_scratch_0, ..., pad_scratch_{L-1}]
        x_ref = refs[0]
        layer_refs = refs[1:1 + 2 * num_layers]
        o_ref = refs[1 + 2 * num_layers]
        pad_refs = refs[2 + 2 * num_layers:]

        cur = x_ref[...]                               # (H, W*Cin_0), pre-ReLU
        for l in range(num_layers):
            band_ref = layer_refs[2 * l]               # (K, W*Cin_l, W*Cout_l)
            bias_ref = layer_refs[2 * l + 1]           # (1, W*Cout_l)
            pad_ref = pad_refs[l]                      # (H + 2p, W*Cin_l) scratch

            # ReLU once, store zero-padded (halo rows) into VMEM scratch so the
            # K shifted matmul LHS come straight from ref slices (no relayout
            # copies of a shifted live value).
            pad_ref[...] = jnp.zeros_like(pad_ref)
            pad_ref[p:p + H, :] = jnp.maximum(cur, 0.0).astype(pad_ref.dtype)

            wc_out = band_ref.shape[2]
            # Bias folded into the accumulator init (no separate full-tile add).
            acc = jnp.broadcast_to(bias_ref[...], (H, wc_out)).astype(jnp.float32)
            # Direct conv as K sublane-shifted MXU matmuls: the (w, kw, ci)
            # contraction is a single lane-axis dot against the banded weight,
            # output produced directly in its lane-dense (W*Cout) layout.
            for kh in range(K):
                acc = acc + jnp.dot(pad_ref[kh:kh + H, :], band_ref[kh],
                                    preferred_element_type=jnp.float32)

            if l == num_layers - 1:
                o_ref[...] = acc.astype(o_ref.dtype)   # lane-dense unmasked store
            else:
                cur = acc                              # stays in VMEM/vregs
    return kernel


# --------------------------------------------------------------------------
# Wrapper-side glue (layout only; all compute is inside the kernel)
# --------------------------------------------------------------------------
def _banded_weight(weight_oikk, W, p):
    """Banded (Toeplitz) weight: (K, W*Cin, W*Cout).

    band[kh, wj*Cin+ci, w*Cout+o] = weight[o, ci, kh, wj-w+p] if 0<=wj-w+p<K else 0.
    W-boundary 'same' zero padding is folded in by dropping out-of-range taps,
    so the input needs no W padding and the lane contraction depth is W*Cin.
    TODO(synk): for W*Cin / W*Cout >~ 512 this O(W^2) band should be W-tiled or
    replaced by KxK compact matmuls with pltpu.roll lane shifts.
    """
    Cout, Cin, K, _ = weight_oikk.shape
    w_kkio = jnp.transpose(weight_oikk, (2, 3, 1, 0))           # (Kh, Kw, Cin, Cout)
    wj = jnp.arange(W)[:, None]                                 # input column
    wo = jnp.arange(W)[None, :]                                 # output column
    kw = wj - wo + p                                            # (W, W)
    valid = (kw >= 0) & (kw < K)
    kw_c = jnp.clip(kw, 0, K - 1)
    gathered = w_kkio[:, kw_c]                                  # (Kh, W, W, Cin, Cout)
    gathered = jnp.where(valid[None, :, :, None, None], gathered, 0.0)
    band = jnp.transpose(gathered, (0, 1, 3, 2, 4))             # (Kh, W, Cin, W, Cout)
    return band.reshape(K, W * Cin, W * Cout)


def _vmem_budget_bytes(default=32 * 1024 * 1024):
    """Device-derived VMEM budget (v7x has 64 MiB vs 128 MiB on v5e/v6e)."""
    try:
        info = pltpu.get_tpu_info()
        cap = getattr(info, "vmem_capacity_bytes", None)
        if cap:
            return int(min(cap // 2, 128 * 1024 * 1024))
    except Exception:
        pass
    return default


def cnn_forward(x_nchw, params, kernel_size):
    """CNN.forward (res=False): nn.Sequential of ConvBlock(conv(relu(x))).

    One fused pallas_call over the whole layer stack; grid over batch only.
    """
    N, C0, H, W = x_nchw.shape
    K = kernel_size
    assert K % 2 == 1, "padding='same' exact match implemented for odd K"
    p = (K - 1) // 2
    L = len(params)
    chans = [C0] + [w.shape[0] for (w, _) in params]
    for (w, _), cin in zip(params, chans[:-1]):
        assert w.shape[1] == cin and w.shape[2] == K and w.shape[3] == K

    # Layout glue only: NCHW -> NHWC once, then a free reshape to a lane-dense
    # (N, H, W*Cin) slab. No padding, no halo materialization.
    x_slab = jnp.transpose(x_nchw, (0, 2, 3, 1)).reshape(N, H, W * C0)

    inputs = [x_slab]
    in_specs = [pl.BlockSpec((None, H, W * C0), lambda n: (n, 0, 0))]
    scratch_shapes = []
    vmem_est = 2 * H * W * (chans[0] + chans[-1]) * 4           # in/out blocks (2x buffered)
    for l, (w, b) in enumerate(params):
        cin, cout = chans[l], chans[l + 1]
        band = _banded_weight(w, W, p)                          # (K, W*Cin, W*Cout)
        bias = jnp.tile(b, W).reshape(1, W * cout)              # bias[o] at lane w*Cout+o
        inputs += [band, bias]
        # Weights / bias are grid-invariant (constant block index) -> DMA'd once.
        in_specs += [pl.BlockSpec((K, W * cin, W * cout), lambda n: (0, 0, 0)),
                     pl.BlockSpec((1, W * cout), lambda n: (0, 0))]
        scratch_shapes.append(pltpu.VMEM((H + 2 * p, W * cin), jnp.float32))
        vmem_est += 2 * (K * W * cin * W * cout + W * cout) * 4 + (H + 2 * p) * W * cin * 4

    vmem_budget = _vmem_budget_bytes()
    assert vmem_est < vmem_budget, (
        f"fused CNN kernel needs ~{vmem_est} B VMEM > budget {vmem_budget} B; "
        "tile W / H for this problem size")  # TODO(synk): add W/H tiling path

    kernel = _make_fused_kernel(L, K, H, p)
    out_slab = pl.pallas_call(
        kernel,
        out_shape=jax.ShapeDtypeStruct((N, H, W * chans[-1]), x_nchw.dtype),
        grid=(N,),                                              # >=2 parallel steps keeps
        in_specs=in_specs,                                      # both v7x TCs busy
        out_specs=pl.BlockSpec((None, H, W * chans[-1]), lambda n: (n, 0, 0)),
        scratch_shapes=scratch_shapes,
        compiler_params=pltpu.CompilerParams(
            dimension_semantics=("parallel",),
            vmem_limit_bytes=vmem_budget,
        ),
    )(*inputs)

    out_nhwc = out_slab.reshape(N, H, W, chans[-1])
    return jnp.transpose(out_nhwc, (0, 3, 1, 2))                # back to NCHW


# --------------------------------------------------------------------------
# Pure-JAX reference (lax conv chain) for the correctness check
# --------------------------------------------------------------------------
def _reference_cnn(x_nchw, params):
    h = x_nchw
    for w, b in params:
        h = jnp.maximum(h, 0.0)
        h = jax.lax.conv_general_dilated(
            h, w, window_strides=(1, 1), padding="SAME",
            dimension_numbers=("NCHW", "OIHW", "NCHW"),
            precision=jax.lax.Precision.HIGHEST)
        h = h + b.reshape(1, -1, 1, 1)
    return h


if __name__ == "__main__":
    # CNN(chans=[4, 8, 8], kernel_size=3, conv=nn.Conv2d, nonlinearity=nn.ReLU(),
    #     res=False): two ConvBlocks, each Conv2d(padding='same')(ReLU(x)).
    chans = [4, 8, 8]
    K = 3
    N, H, W = 2, 16, 16

    key = jax.random.PRNGKey(0)
    key, kx = jax.random.split(key)
    x = jax.random.normal(kx, (N, chans[0], H, W), dtype=jnp.float32)

    params = []
    for cin, cout in zip(chans[:-1], chans[1:]):
        key, k_w, k_b = jax.random.split(key, 3)
        bound = 1.0 / (cin * K * K) ** 0.5       # PyTorch Conv2d default init range
        w = jax.random.uniform(k_w, (cout, cin, K, K),
                               minval=-bound, maxval=bound, dtype=jnp.float32)
        b = jax.random.uniform(k_b, (cout,),
                               minval=-bound, maxval=bound, dtype=jnp.float32)
        params.append((w, b))

    cnn = jax.jit(functools.partial(cnn_forward, kernel_size=K))
    out = jax.block_until_ready(cnn(x, params))

    ref = _reference_cnn(x, params)
    assert out.shape == (N, chans[-1], H, W)
    assert jnp.allclose(out, ref, atol=1e-3, rtol=1e-3), "mismatch vs lax.conv reference"

    print("KERNEL_OK")
</pallas_src>

<mosaic_0001>
module attributes {stable_mosaic.version = 11 : i64} {
  func.func @kernel(%arg0: i32, %arg1: memref<1x16x64xf32, #tpu.memory_space<vmem>>, %arg2: memref<3x64x128xf32, #tpu.memory_space<vmem>>, %arg3: memref<1x128xf32, #tpu.memory_space<vmem>>, %arg4: memref<3x128x128xf32, #tpu.memory_space<vmem>>, %arg5: memref<1x128xf32, #tpu.memory_space<vmem>>, %arg6: memref<1x16x128xf32, #tpu.memory_space<vmem>>, %arg7: memref<18x64xf32, #tpu.memory_space<vmem>>, %arg8: memref<18x128xf32, #tpu.memory_space<vmem>>) attributes {dimension_semantics = [#tpu.dimension_semantics<parallel>], iteration_bounds = array<i64: 2>, scalar_prefetch = 0 : i64, scratch_operands = 2 : i64, tpu.core_type = #tpu.core_type<tc>, window_params = [{transform_indices = @transform_0, window_bounds = array<i64: 1, 16, 64>}, {pipeline_mode = #tpu.pipeline_mode<synchronous>, transform_indices = @transform_1, window_bounds = array<i64: 3, 64, 128>}, {pipeline_mode = #tpu.pipeline_mode<synchronous>, transform_indices = @transform_2, window_bounds = array<i64: 1, 128>}, {pipeline_mode = #tpu.pipeline_mode<synchronous>, transform_indices = @transform_3, window_bounds = array<i64: 3, 128, 128>}, {pipeline_mode = #tpu.pipeline_mode<synchronous>, transform_indices = @transform_4, window_bounds = array<i64: 1, 128>}, {transform_indices = @transform_5, window_bounds = array<i64: 1, 16, 128>}]} {
    %c0 = arith.constant 0 : index
    %c0_0 = arith.constant 0 : index
    %c0_1 = arith.constant 0 : index
    %0 = vector.load %arg1[%c0, %c0_0, %c0_1] : memref<1x16x64xf32, #tpu.memory_space<vmem>>, vector<1x16x64xf32>
    %1 = vector.shape_cast %0 : vector<1x16x64xf32> to vector<16x64xf32>
    %cst = arith.constant 0.000000e+00 : f32
    %2 = vector.broadcast %cst : f32 to vector<18x64xf32>
    %c0_2 = arith.constant 0 : index
    %c0_3 = arith.constant 0 : index
    %3 = vector.load %arg7[%c0_2, %c0_3] : memref<18x64xf32, #tpu.memory_space<vmem>>, vector<18x64xf32>
    tpu.vector_store %arg7[%c0_2, %c0_3], %2 {strides = array<i32>} : memref<18x64xf32, #tpu.memory_space<vmem>>, vector<18x64xf32>,
    %cst_4 = arith.constant 0.000000e+00 : f32
    %4 = vector.broadcast %cst_4 : f32 to vector<16x64xf32>
    %5 = arith.maximumf %1, %4 : vector<16x64xf32>
    %c1 = arith.constant 1 : index
    %c0_5 = arith.constant 0 : index
    %6 = vector.load %arg7[%c1, %c0_5] : memref<18x64xf32, #tpu.memory_space<vmem>>, vector<16x64xf32>
    tpu.vector_store %arg7[%c1, %c0_5], %5 {strides = array<i32>} : memref<18x64xf32, #tpu.memory_space<vmem>>, vector<16x64xf32>,
    %c0_6 = arith.constant 0 : index
    %c0_7 = arith.constant 0 : index
    %7 = vector.load %arg3[%c0_6, %c0_7] : memref<1x128xf32, #tpu.memory_space<vmem>>, vector<1x128xf32>
    %8 = vector.shape_cast %7 : vector<1x128xf32> to vector<1x128xf32>
    %9 = vector.broadcast %8 : vector<1x128xf32> to vector<16x128xf32>
    %c0_8 = arith.constant 0 : index
    %c0_9 = arith.constant 0 : index
    %10 = vector.load %arg7[%c0_8, %c0_9] : memref<18x64xf32, #tpu.memory_space<vmem>>, vector<16x64xf32>
    %c0_10 = arith.constant 0 : index
    %c0_11 = arith.constant 0 : index
    %c0_12 = arith.constant 0 : index
    %11 = vector.load %arg2[%c0_10, %c0_11, %c0_12] : memref<3x64x128xf32, #tpu.memory_space<vmem>>, vector<1x64x128xf32>
    %12 = vector.shape_cast %11 : vector<1x64x128xf32> to vector<64x128xf32>
    %cst_13 = arith.constant dense<0.000000e+00> : vector<16x128xf32>
    %13 = tpu.matmul %10, %12, %cst_13 {dimension_numbers = #tpu.dot_dimension_numbers<[1], [0], [0], [1], [0, 0, 1, 1], [], []>} : vector<16x64xf32>, vector<64x128xf32>, vector<16x128xf32> -> vector<16x128xf32>
    %14 = arith.addf %9, %13 : vector<16x128xf32>
    %c1_14 = arith.constant 1 : index
    %c0_15 = arith.constant 0 : index
    %15 = vector.load %arg7[%c1_14, %c0_15] : memref<18x64xf32, #tpu.memory_space<vmem>>, vector<16x64xf32>
    %c1_16 = arith.constant 1 : index
    %c0_17 = arith.constant 0 : index
    %c0_18 = arith.constant 0 : index
    %16 = vector.load %arg2[%c1_16, %c0_17, %c0_18] : memref<3x64x128xf32, #tpu.memory_space<vmem>>, vector<1x64x128xf32>
    %17 = vector.shape_cast %16 : vector<1x64x128xf32> to vector<64x128xf32>
    %cst_19 = arith.constant dense<0.000000e+00> : vector<16x128xf32>
    %18 = tpu.matmul %15, %17, %cst_19 {dimension_numbers = #tpu.dot_dimension_numbers<[1], [0], [0], [1], [0, 0, 1, 1], [], []>} : vector<16x64xf32>, vector<64x128xf32>, vector<16x128xf32> -> vector<16x128xf32>
    %19 = arith.addf %14, %18 : vector<16x128xf32>
    %c2 = arith.constant 2 : index
    %c0_20 = arith.constant 0 : index
    %20 = vector.load %arg7[%c2, %c0_20] : memref<18x64xf32, #tpu.memory_space<vmem>>, vector<16x64xf32>
    %c2_21 = arith.constant 2 : index
    %c0_22 = arith.constant 0 : index
    %c0_23 = arith.constant 0 : index
    %21 = vector.load %arg2[%c2_21, %c0_22, %c0_23] : memref<3x64x128xf32, #tpu.memory_space<vmem>>, vector<1x64x128xf32>
    %22 = vector.shape_cast %21 : vector<1x64x128xf32> to vector<64x128xf32>
    %cst_24 = arith.constant dense<0.000000e+00> : vector<16x128xf32>
    %23 = tpu.matmul %20, %22, %cst_24 {dimension_numbers = #tpu.dot_dimension_numbers<[1], [0], [0], [1], [0, 0, 1, 1], [], []>} : vector<16x64xf32>, vector<64x128xf32>, vector<16x128xf32> -> vector<16x128xf32>
    %24 = arith.addf %19, %23 : vector<16x128xf32>
    %cst_25 = arith.constant 0.000000e+00 : f32
    %25 = vector.broadcast %cst_25 : f32 to vector<18x128xf32>
    %c0_26 = arith.constant 0 : index
    %c0_27 = arith.constant 0 : index
    %26 = vector.load %arg8[%c0_26, %c0_27] : memref<18x128xf32, #tpu.memory_space<vmem>>, vector<18x128xf32>
    tpu.vector_store %arg8[%c0_26, %c0_27], %25 {strides = array<i32>} : memref<18x128xf32, #tpu.memory_space<vmem>>, vector<18x128xf32>,
    %cst_28 = arith.constant 0.000000e+00 : f32
    %27 = vector.broadcast %cst_28 : f32 to vector<16x128xf32>
    %28 = arith.maximumf %24, %27 : vector<16x128xf32>
    %c1_29 = arith.constant 1 : index
    %c0_30 = arith.constant 0 : index
    %29 = vector.load %arg8[%c1_29, %c0_30] : memref<18x128xf32, #tpu.memory_space<vmem>>, vector<16x128xf32>
    tpu.vector_store %arg8[%c1_29, %c0_30], %28 {strides = array<i32>} : memref<18x128xf32, #tpu.memory_space<vmem>>, vector<16x128xf32>,
    %c0_31 = arith.constant 0 : index
    %c0_32 = arith.constant 0 : index
    %30 = vector.load %arg5[%c0_31, %c0_32] : memref<1x128xf32, #tpu.memory_space<vmem>>, vector<1x128xf32>
    %31 = vector.shape_cast %30 : vector<1x128xf32> to vector<1x128xf32>
    %32 = vector.broadcast %31 : vector<1x128xf32> to vector<16x128xf32>
    %c0_33 = arith.constant 0 : index
    %c0_34 = arith.constant 0 : index
    %33 = vector.load %arg8[%c0_33, %c0_34] : memref<18x128xf32, #tpu.memory_space<vmem>>, vector<16x128xf32>
    %c0_35 = arith.constant 0 : index
    %c0_36 = arith.constant 0 : index
    %c0_37 = arith.constant 0 : index
    %34 = vector.load %arg4[%c0_35, %c0_36, %c0_37] : memref<3x128x128xf32, #tpu.memory_space<vmem>>, vector<1x128x128xf32>
    %35 = vector.shape_cast %34 : vector<1x128x128xf32> to vector<128x128xf32>
    %cst_38 = arith.constant dense<0.000000e+00> : vector<16x128xf32>
    %36 = tpu.matmul %33, %35, %cst_38 {dimension_numbers = #tpu.dot_dimension_numbers<[1], [0], [0], [1], [0, 0, 1, 1], [], []>} : vector<16x128xf32>, vector<128x128xf32>, vector<16x128xf32> -> vector<16x128xf32>
    %37 = arith.addf %32, %36 : vector<16x128xf32>
    %c1_39 = arith.constant 1 : index
    %c0_40 = arith.constant 0 : index
    %38 = vector.load %arg8[%c1_39, %c0_40] : memref<18x128xf32, #tpu.memory_space<vmem>>, vector<16x128xf32>
    %c1_41 = arith.constant 1 : index
    %c0_42 = arith.constant 0 : index
    %c0_43 = arith.constant 0 : index
    %39 = vector.load %arg4[%c1_41, %c0_42, %c0_43] : memref<3x128x128xf32, #tpu.memory_space<vmem>>, vector<1x128x128xf32>
    %40 = vector.shape_cast %39 : vector<1x128x128xf32> to vector<128x128xf32>
    %cst_44 = arith.constant dense<0.000000e+00> : vector<16x128xf32>
    %41 = tpu.matmul %38, %40, %cst_44 {dimension_numbers = #tpu.dot_dimension_numbers<[1], [0], [0], [1], [0, 0, 1, 1], [], []>} : vector<16x128xf32>, vector<128x128xf32>, vector<16x128xf32> -> vector<16x128xf32>
    %42 = arith.addf %37, %41 : vector<16x128xf32>
    %c2_45 = arith.constant 2 : index
    %c0_46 = arith.constant 0 : index
    %43 = vector.load %arg8[%c2_45, %c0_46] : memref<18x128xf32, #tpu.memory_space<vmem>>, vector<16x128xf32>
    %c2_47 = arith.constant 2 : index
    %c0_48 = arith.constant 0 : index
    %c0_49 = arith.constant 0 : index
    %44 = vector.load %arg4[%c2_47, %c0_48, %c0_49] : memref<3x128x128xf32, #tpu.memory_space<vmem>>, vector<1x128x128xf32>
    %45 = vector.shape_cast %44 : vector<1x128x128xf32> to vector<128x128xf32>
    %cst_50 = arith.constant dense<0.000000e+00> : vector<16x128xf32>
    %46 = tpu.matmul %43, %45, %cst_50 {dimension_numbers = #tpu.dot_dimension_numbers<[1], [0], [0], [1], [0, 0, 1, 1], [], []>} : vector<16x128xf32>, vector<128x128xf32>, vector<16x128xf32> -> vector<16x128xf32>
    %47 = arith.addf %42, %46 : vector<16x128xf32>
    %c0_51 = arith.constant 0 : index
    %c0_52 = arith.constant 0 : index
    %c0_53 = arith.constant 0 : index
    %48 = vector.load %arg6[%c0_51, %c0_52, %c0_53] : memref<1x16x128xf32, #tpu.memory_space<vmem>>, vector<1x16x128xf32>
    %49 = vector.shape_cast %48 : vector<1x16x128xf32> to vector<16x128xf32>
    %50 = vector.shape_cast %47 : vector<16x128xf32> to vector<1x16x128xf32>
    tpu.vector_store %arg6[%c0_51, %c0_52, %c0_53], %50 {strides = array<i32>} : memref<1x16x128xf32, #tpu.memory_space<vmem>>, vector<1x16x128xf32>,
    return
  }
  func.func @transform_0(%arg0: i32) -> (i32, i32, i32) {
    %c0_i32 = arith.constant 0 : i32
    %c0_i32_0 = arith.constant 0 : i32
    %c0_i32_1 = arith.constant 0 : i32
    return %arg0, %c0_i32, %c0_i32_0 : i32, i32, i32
  }
  func.func @transform_1(%arg0: i32) -> (i32, i32, i32) {
    %c0_i32 = arith.constant 0 : i32
    %c0_i32_0 = arith.constant 0 : i32
    %c0_i32_1 = arith.constant 0 : i32
    %c0_i32_2 = arith.constant 0 : i32
    return %c0_i32, %c0_i32_0, %c0_i32_1 : i32, i32, i32
  }
  func.func @transform_2(%arg0: i32) -> (i32, i32) {
    %c0_i32 = arith.constant 0 : i32
    %c0_i32_0 = arith.constant 0 : i32
    %c0_i32_1 = arith.constant 0 : i32
    return %c0_i32, %c0_i32_0 : i32, i32
  }
  func.func @transform_3(%arg0: i32) -> (i32, i32, i32) {
    %c0_i32 = arith.constant 0 : i32
    %c0_i32_0 = arith.constant 0 : i32
    %c0_i32_1 = arith.constant 0 : i32
    %c0_i32_2 = arith.constant 0 : i32
    return %c0_i32, %c0_i32_0, %c0_i32_1 : i32, i32, i32
  }
  func.func @transform_4(%arg0: i32) -> (i32, i32) {
    %c0_i32 = arith.constant 0 : i32
    %c0_i32_0 = arith.constant 0 : i32
    %c0_i32_1 = arith.constant 0 : i32
    return %c0_i32, %c0_i32_0 : i32, i32
  }
  func.func @transform_5(%arg0: i32) -> (i32, i32, i32) {
    %c0_i32 = arith.constant 0 : i32
    %c0_i32_0 = arith.constant 0 : i32
    %c0_i32_1 = arith.constant 0 : i32
    return %arg0, %c0_i32, %c0_i32_0 : i32, i32, i32
  }
}

</mosaic_0001>

<llo_original>
// kernel: tile.13
$region0: #{tile.13}
  #allocation0 [shape = 's32[1]{0}', space=sflag, size = 0x4, scoped, tag = 'scoped memory for tile.13']
  %s0 = inlined_call_operand.vmem [shape: f32[8], index: 0, kind: input, shape index: {}]
  %s1 = inlined_call_operand.vmem [shape: f32[16,8], index: 1, kind: output, shape index: {}]
  // Predicated region
  $region2: #{tile.13} parent=0 // pred_check
    _
  $region3: #{tile.13} parent=0 // pred_check_branch
    %3 = sbr.rel (0) target = $region5
  $region4: #{tile.13} parent=0 // pred_region
    _
  $region5: #{tile.13} parent=0 // pred_fallthru
    _
  %v4 = vld [vmem:[%s0] ss:$0 sm:$0xff]
  %5 = vst [vmem:[%s1] sm:$0xff] %v4
  %s6 = scalar_lea.vmem %s1, 8
  %7 = vst [vmem:[%s6] sm:$0xff] %v4

// kernel: tile.14
$region0: #{tile.14}
  %s0 = inlined_call_operand.vmem [shape: f32[16,8], index: 0, kind: input, shape index: {}]
  %s1 = inlined_call_operand.vmem [shape: f32[1,128], index: 1, kind: output, shape index: {}]
  $region1: #{tile.14} parent=0
    #allocation0 [shape = 'u8[4096]{0}', space=vmem, size = 0x1000, scoped, tag = 'scoped mem for output reshape']
    %v2 = vld [vmem:[%s0] sm:$0x1]
    %vm3 = vcmask 64512
    %4 = vst.msk [vmem:[#allocation0] sm:$0x1] %vm3, %v2
    %s5 = scalar_lea.vmem %s0, 15
    %v6 = vld [vmem:[%s5] sm:$0x1]
    %7 = vrot.lane.b32.xlu0 %v6, 120
    %v8 = vpop.permute.xlu0 %7
    %vm9 = vcmask 1048512
    %10 = vst.msk [vmem:[#allocation0] sm:$0x1] %vm9, %v8
    %s11 = scalar_lea.vmem %s0, 14
    %v12 = vld [vmem:[%s11] sm:$0x1]
    %13 = vrot.lane.b32.xlu0 %v12, 112
    %v14 = vpop.permute.xlu0 %13
    %vm15 = vcmask 982912
    %16 = vst.msk [vmem:[#allocation0] sm:$0x1] %vm15, %v14
    %s17 = scalar_lea.vmem %s0, 13
    %v18 = vld [vmem:[%s17] sm:$0x1]
    %19 = vrot.lane.b32.xlu0 %v18, 104
    %v20 = vpop.permute.xlu0 %19
    %vm21 = vcmask 917312
    %22 = vst.msk [vmem:[#allocation0] sm:$0x1] %vm21, %v20
    %s23 = scalar_lea.vmem %s0, 12
    %v24 = vld [vmem:[%s23] sm:$0x1]
    %25 = vrot.lane.b32.xlu0 %v24, 96
    %v26 = vpop.permute.xlu0 %25
    %vm27 = vcmask 851712
    %28 = vst.msk [vmem:[#allocation0] sm:$0x1] %vm27, %v26
    %s29 = scalar_lea.vmem %s0, 11
    %v30 = vld [vmem:[%s29] sm:$0x1]
    %31 = vrot.lane.b32.xlu0 %v30, 88
    %v32 = vpop.permute.xlu0 %31
    %vm33 = vcmask 786112
    %34 = vst.msk [vmem:[#allocation0] sm:$0x1] %vm33, %v32
    %s35 = scalar_lea.vmem %s0, 10
    %v36 = vld [vmem:[%s35] sm:$0x1]
    %37 = vrot.lane.b32.xlu0 %v36, 80
    %v38 = vpop.permute.xlu0 %37
    %vm39 = vcmask 720512
    %40 = vst.msk [vmem:[#allocation0] sm:$0x1] %vm39, %v38
    %s41 = scalar_lea.vmem %s0, 9
    %v42 = vld [vmem:[%s41] sm:$0x1]
    %43 = vrot.lane.b32.xlu0 %v42, 72
    %v44 = vpop.permute.xlu0 %43
    %vm45 = vcmask 654912
    %46 = vst.msk [vmem:[#allocation0] sm:$0x1] %vm45, %v44
    %s47 = scalar_lea.vmem %s0, 8
    %v48 = vld [vmem:[%s47] sm:$0x1]
    %49 = vrot.lane.b32.xlu0 %v48, 64
    %v50 = vpop.permute.xlu0 %49
    %vm51 = vcmask 589312
    %52 = vst.msk [vmem:[#allocation0] sm:$0x1] %vm51, %v50
    %s53 = scalar_lea.vmem %s0, 7
    %v54 = vld [vmem:[%s53] sm:$0x1]
    %55 = vrot.lane.b32.xlu0 %v54, 56
    %v56 = vpop.permute.xlu0 %55
    %vm57 = vcmask 523712
    %58 = vst.msk [vmem:[#allocation0] sm:$0x1] %vm57, %v56
    %s59 = scalar_lea.vmem %s0, 6
    %v60 = vld [vmem:[%s59] sm:$0x1]
    %61 = vrot.lane.b32.xlu0 %v60, 48
    %v62 = vpop.permute.xlu0 %61
    %vm63 = vcmask 458112
    %64 = vst.msk [vmem:[#allocation0] sm:$0x1] %vm63, %v62
    %s65 = scalar_lea.vmem %s0, 5
    %v66 = vld [vmem:[%s65] sm:$0x1]
    %67 = vrot.lane.b32.xlu0 %v66, 40
    %v68 = vpop.permute.xlu0 %67
    %vm69 = vcmask 392512
    %70 = vst.msk [vmem:[#allocation0] sm:$0x1] %vm69, %v68
    %s71 = scalar_lea.vmem %s0, 4
    %v72 = vld [vmem:[%s71] sm:$0x1]
    %73 = vrot.lane.b32.xlu0 %v72, 32
    %v74 = vpop.permute.xlu0 %73
    %vm75 = vcmask 326912
    %76 = vst.msk [vmem:[#allocation0] sm:$0x1] %vm75, %v74
    %s77 = scalar_lea.vmem %s0, 3
    %v78 = vld [vmem:[%s77] sm:$0x1]
    %79 = vrot.lane.b32.xlu0 %v78, 24
    %v80 = vpop.permute.xlu0 %79
    %vm81 = vcmask 261312
    %82 = vst.msk [vmem:[#allocation0] sm:$0x1] %vm81, %v80
    %s83 = scalar_lea.vmem %s0, 2
    %v84 = vld [vmem:[%s83] sm:$0x1]
    %85 = vrot.lane.b32.xlu0 %v84, 16
    %v86 = vpop.permute.xlu0 %85
    %vm87 = vcmask 195712
    %88 = vst.msk [vmem:[#allocation0] sm:$0x1] %vm87, %v86
    %s89 = scalar_lea.vmem %s0, 1
    %v90 = vld [vmem:[%s89] sm:$0x1]
    %91 = vrot.lane.b32.xlu0 %v90, 8
    %v92 = vpop.permute.xlu0 %91
    %vm93 = vcmask 130112
    %94 = vst.msk [vmem:[#allocation0] sm:$0x1] %vm93, %v92
    %s96 = sshll.u32 1, 1
    %s97 = ssub.s32 %s96, 1
    %v99 = vld [vmem:[#allocation0] sm:%s97]
    %s100 = sshll.u32 1, 1
    %s101 = ssub.s32 %s100, 1
    %102 = vst [vmem:[%s1] sm:%s101] %v99

// kernel: cnn_forward.1
$region0: #{cnn_forward.1}
  #allocation0 [shape = 'u32[]', space=smem, size = 0x4, offset = 0x4, fixed_abs, tag = 'smem constant byte address 0x4 - core index']
  #allocation1 [shape = 'u32[144,128]{1,0:T(1,128)}', space=vmem, size = 0x12000, scoped, tag = 'internal scratch']
  #allocation2 [shape = 'f32[18,64]{1,0:T(8,128)}', space=vmem, size = 0x3000, scoped, tag = 'scratch operand']
  #allocation3 [shape = 'f32[18,128]{1,0:T(8,128)}', space=vmem, size = 0x3000, scoped, tag = 'scratch operand']
  %s0 = inlined_call_operand.vmem [shape: f32[2,16,64], index: 0, kind: input, shape index: {}]
  %s1 = inlined_call_operand.vmem [shape: f32[3,64,128], index: 1, kind: input, shape index: {}]
  %s2 = inlined_call_operand.vmem [shape: f32[1,128], index: 2, kind: input, shape index: {}]
  %s3 = inlined_call_operand.vmem [shape: f32[3,128,128], index: 3, kind: input, shape index: {}]
  %s4 = inlined_call_operand.vmem [shape: f32[1,128], index: 4, kind: input, shape index: {}]
  %s5 = inlined_call_operand.vmem [shape: f32[2,16,128], index: 5, kind: output, shape index: {}]
  %s6 = sld [smem:[#allocation0]]
  $region53: #{cnn_forward.1} parent=0
    _
  %s8 = ssub.s32 1, %s6
  %s9 = scalar_select 0, %s8, %s6
  loop: start=0, step=1, limit=4
  $region2: #{cnn_forward.1} parent=0 // loop_pre_header
    _
  $region3: #{cnn_forward.1} parent=0 // loop_header
    %s11 = sphi 0, %s15
    %p12 = scmp.ge.s32.totalorder %s11, 4
    %s21 = sphi 0, %s23
    %s24 = sphi 0, %s21
    %s25 = sphi 0, %s24
    %s41 = sphi 0, %s25
    %s45 = sphi 0, %s45
    %s47 = sphi 0, %s45
    %s48 = sphi 0, %s47
    %s62 = sphi 0, %s48
    %s66 = sphi 0, %s66
    %s68 = sphi 0, %s66
    %s69 = sphi 0, %s68
    %s83 = sphi 0, %s69
    %s87 = sphi 0, %s87
    %s89 = sphi 0, %s87
    %s90 = sphi 0, %s89
    %s104 = sphi 0, %s90
    %s108 = sphi 0, %s108
    %s110 = sphi 0, %s108
    %s111 = sphi 0, %s110
    %s125 = sphi 0, %s111
    %s131 = sphi 0, %s133
    %s134 = sphi 0, %s131
    %s135 = sphi 0, %s134
    %s151 = sphi 0, %s135
  $region4: #{cnn_forward.1} parent=0 // loop_header_branch
    %14 = sbr.rel (%p12) target = $region8
  $region5: #{cnn_forward.1} parent=0 // loop_body
    %s16 = ssub.s32 %s11, 1
    %s17 = ssub.s32 %s11, 2
    %s18 = sadd.s32 %s11, 1
    %s19 = ssub.s32 %s11, %s18
    %p20 = scmp.eq.s32.totalorder %s19, 0
    %s22 = sadd.s32 %s21, 1
    %s23 = scalar_select %p20, %s21, %s22
    %p26 = pneg %p20
    %p27 = scmp.eq.s32.totalorder %s11, 1
    %p28 = por %p26, %p27
    %p29 = scmp.ne.s32.totalorder %s21, %s24
    %p30 = scmp.eq.s32.totalorder %s11, 0
    %p31 = por %p29, %p30
    %p32 = scmp.ne.s32.totalorder %s21, %s24
    %p33 = scmp.eq.s32.totalorder %s16, 1
    %p34 = por %p32, %p33
    %p35 = scmp.ne.s32.totalorder %s24, %s25
    %p36 = scmp.eq.s32.totalorder %s16, 0
    %p37 = por %p35, %p36
    %p38 = scmp.ne.s32.totalorder %s24, %s25
    %p39 = scmp.eq.s32.totalorder %s17, 1
    %p40 = por %p38, %p39
    %p42 = scmp.ne.s32.totalorder %s25, %s41
    %p43 = scmp.eq.s32.totalorder %s17, 0
    %p44 = por %p42, %p43
    %s46 = sadd.s32 %s45, 1
    %p49 = scmp.eq.s32.totalorder %s11, 1
    %p50 = scmp.ne.s32.totalorder %s45, %s47
    %p51 = scmp.eq.s32.totalorder %s11, 0
    %p52 = por %p50, %p51
    %p53 = scmp.ne.s32.totalorder %s45, %s47
    %p54 = scmp.eq.s32.totalorder %s16, 1
    %p55 = por %p53, %p54
    %p56 = scmp.ne.s32.totalorder %s47, %s48
    %p57 = scmp.eq.s32.totalorder %s16, 0
    %p58 = por %p56, %p57
    %p59 = scmp.ne.s32.totalorder %s47, %s48
    %p60 = scmp.eq.s32.totalorder %s17, 1
    %p61 = por %p59, %p60
    %p63 = scmp.ne.s32.totalorder %s48, %s62
    %p64 = scmp.eq.s32.totalorder %s17, 0
    %p65 = por %p63, %p64
    %s67 = sadd.s32 %s66, 1
    %p70 = scmp.eq.s32.totalorder %s11, 1
    %p71 = scmp.ne.s32.totalorder %s66, %s68
    %p72 = scmp.eq.s32.totalorder %s11, 0
    %p73 = por %p71, %p72
    %p74 = scmp.ne.s32.totalorder %s66, %s68
    %p75 = scmp.eq.s32.totalorder %s16, 1
    %p76 = por %p74, %p75
    %p77 = scmp.ne.s32.totalorder %s68, %s69
    %p78 = scmp.eq.s32.totalorder %s16, 0
    %p79 = por %p77, %p78
    %p80 = scmp.ne.s32.totalorder %s68, %s69
    %p81 = scmp.eq.s32.totalorder %s17, 1
    %p82 = por %p80, %p81
    %p84 = scmp.ne.s32.totalorder %s69, %s83
    %p85 = scmp.eq.s32.totalorder %s17, 0
    %p86 = por %p84, %p85
    %s88 = sadd.s32 %s87, 1
    %p91 = scmp.eq.s32.totalorder %s11, 1
    %p92 = scmp.ne.s32.totalorder %s87, %s89
    %p93 = scmp.eq.s32.totalorder %s11, 0
    %p94 = por %p92, %p93
    %p95 = scmp.ne.s32.totalorder %s87, %s89
    %p96 = scmp.eq.s32.totalorder %s16, 1
    %p97 = por %p95, %p96
    %p98 = scmp.ne.s32.totalorder %s89, %s90
    %p99 = scmp.eq.s32.totalorder %s16, 0
    %p100 = por %p98, %p99
    %p101 = scmp.ne.s32.totalorder %s89, %s90
    %p102 = scmp.eq.s32.totalorder %s17, 1
    %p103 = por %p101, %p102
    %p105 = scmp.ne.s32.totalorder %s90, %s104
    %p106 = scmp.eq.s32.totalorder %s17, 0
    %p107 = por %p105, %p106
    %s109 = sadd.s32 %s108, 1
    %p112 = scmp.eq.s32.totalorder %s11, 1
    %p113 = scmp.ne.s32.totalorder %s108, %s110
    %p114 = scmp.eq.s32.totalorder %s11, 0
    %p115 = por %p113, %p114
    %p116 = scmp.ne.s32.totalorder %s108, %s110
    %p117 = scmp.eq.s32.totalorder %s16, 1
    %p118 = por %p116, %p117
    %p119 = scmp.ne.s32.totalorder %s110, %s111
    %p120 = scmp.eq.s32.totalorder %s16, 0
    %p121 = por %p119, %p120
    %p122 = scmp.ne.s32.totalorder %s110, %s111
    %p123 = scmp.eq.s32.totalorder %s17, 1
    %p124 = por %p122, %p123
    %p126 = scmp.ne.s32.totalorder %s111, %s125
    %p127 = scmp.eq.s32.totalorder %s17, 0
    %p128 = por %p126, %p127
    %s129 = ssub.s32 %s11, %s18
    %p130 = scmp.eq.s32.totalorder %s129, 0
    %s132 = sadd.s32 %s131, 1
    %s133 = scalar_select %p130, %s131, %s132
    %p136 = pneg %p130
    %p137 = scmp.eq.s32.totalorder %s11, 1
    %p138 = por %p136, %p137
    %p139 = scmp.ne.s32.totalorder %s131, %s134
    %p140 = scmp.eq.s32.totalorder %s11, 0
    %p141 = por %p139, %p140
    %p142 = scmp.ne.s32.totalorder %s131, %s134
    %p143 = scmp.eq.s32.totalorder %s16, 1
    %p144 = por %p142, %p143
    %p145 = scmp.ne.s32.totalorder %s134, %s135
    %p146 = scmp.eq.s32.totalorder %s16, 0
    %p147 = por %p145, %p146
    %p148 = scmp.ne.s32.totalorder %s134, %s135
    %p149 = scmp.eq.s32.totalorder %s17, 1
    %p150 = por %p148, %p149
    %p152 = scmp.ne.s32.totalorder %s135, %s151
    %p153 = scmp.eq.s32.totalorder %s17, 0
    %p154 = por %p152, %p153
    %p155 = scmp.le.s32.totalorder 1, %s11
    %p156 = scmp.lt.s32.totalorder %s11, 3
    %p157 = pnand %p155, %p156
    %p158 = pneg %p157
    // Predicated region
    $region9: #{cnn_forward.1} parent=5 // pred_check
      _
    $region10: #{cnn_forward.1} parent=5 // pred_check_branch
      %160 = sbr.rel (%p157) target = $region12
    $region11: #{cnn_forward.1} parent=5 // pred_region
      %s161 = ssub.s32 %s11, 1
      // Predicated region
      $region13: #{cnn_forward.1} parent=11 // pred_check
        %p162 = pneg %p58
      $region14: #{cnn_forward.1} parent=11 // pred_check_branch
        %164 = sbr.rel (%p162) target = $region16
      $region15: #{cnn_forward.1} parent=11 // pred_region
        _
      $region16: #{cnn_forward.1} parent=11 // pred_fallthru
        _
      // Predicated region
      $region17: #{cnn_forward.1} parent=11 // pred_check
        %p165 = pneg %p79
      $region18: #{cnn_forward.1} parent=11 // pred_check_branch
        %167 = sbr.rel (%p165) target = $region20
      $region19: #{cnn_forward.1} parent=11 // pred_region
        _
      $region20: #{cnn_forward.1} parent=11 // pred_fallthru
        _
      // Predicated region
      $region21: #{cnn_forward.1} parent=11 // pred_check
        %p168 = pneg %p100
      $region22: #{cnn_forward.1} parent=11 // pred_check_branch
        %170 = sbr.rel (%p168) target = $region24
      $region23: #{cnn_forward.1} parent=11 // pred_region
        _
      $region24: #{cnn_forward.1} parent=11 // pred_fallthru
        _
      // Predicated region
      $region25: #{cnn_forward.1} parent=11 // pred_check
        %p171 = pneg %p121
      $region26: #{cnn_forward.1} parent=11 // pred_check_branch
        %173 = sbr.rel (%p171) target = $region28
      $region27: #{cnn_forward.1} parent=11 // pred_region
        _
      $region28: #{cnn_forward.1} parent=11 // pred_fallthru
        _
    $region12: #{cnn_forward.1} parent=5 // pred_fallthru
      _
    %p174 = scmp.lt.s32.totalorder %s11, 2
    // Predicated region
    $region29: #{cnn_forward.1} parent=5 // pred_check
      %p175 = pneg %p174
    $region30: #{cnn_forward.1} parent=5 // pred_check_branch
      %177 = sbr.rel (%p175) target = $region32
    $region31: #{cnn_forward.1} parent=5 // pred_region
      // Predicated region
      $region33: #{cnn_forward.1} parent=31 // pred_check
        %p178 = pneg %p31
      $region34: #{cnn_forward.1} parent=31 // pred_check_branch
        %180 = sbr.rel (%p178) target = $region36
      $region35: #{cnn_forward.1} parent=31 // pred_region
        %p181 = scmp.lt.s32.totalorder %s11, 1
        %s182 = scalar_select %p181, %s11, 1
        %s183 = smul.addr %s182, 2
        %s184 = smul.addr %s183, 8
        %s185 = scalar_lea.vmem %s0, %s184
      $region36: #{cnn_forward.1} parent=31 // pred_fallthru
        _
    $region32: #{cnn_forward.1} parent=5 // pred_fallthru
      _
    %p186 = scmp.le.s32.totalorder 1, %s11
    %p187 = scmp.lt.s32.totalorder %s11, 3
    %p188 = pnand %p186, %p187
    %p189 = pneg %p188
    // Predicated region
    $region37: #{cnn_forward.1} parent=5 // pred_check
      _
    $region38: #{cnn_forward.1} parent=5 // pred_check_branch
      %191 = sbr.rel (%p188) target = $region40
    $region39: #{cnn_forward.1} parent=5 // pred_region
      %s192 = ssub.s32 %s11, 1
      %p193 = scmp.lt.s32.totalorder %s16, 1
      %s194 = scalar_select %p193, %s16, 1
      %s195 = smul.addr %s194, 2
      %s196 = smul.addr %s195, 8
      %s197 = scalar_lea.vmem %s0, %s196
      %p198 = pneg %p37
      %p199 = pneg %p34
      %p200 = pneg %p58
      %p201 = pneg %p55
      %p202 = pneg %p79
      %p203 = pneg %p76
      %p204 = pneg %p100
      %p205 = pneg %p97
      %p206 = pneg %p121
      %p207 = pneg %p118
      %p208 = pneg %p147
      %p209 = pneg %p144
      %p210 = scmp.lt.s32.totalorder %s16, 1
      %s211 = scalar_select %p210, %s16, 1
      %s212 = smul.addr %s211, 2
      %s213 = smul.addr %s212, 8
      %s214 = scalar_lea.vmem %s5, %s213
      %p215 = scmp.lt.s32.totalorder %s16, 1
      %s216 = scalar_select %p215, %s16, 1
      %s217 = smul.addr %s216, 2
      %s218 = smul.addr %s217, 8
      %s219 = scalar_lea.vmem %s0, %s218
      %p220 = scmp.lt.s32.totalorder %s16, 1
      %s221 = scalar_select %p220, %s16, 1
      %s222 = smul.addr %s221, 2
      %s223 = smul.addr %s222, 8
      %s224 = scalar_lea.vmem %s5, %s223
      %v225 = vld [vmem:[%s219] sm:$0xff]
      %v226 = vld [vmem:[%s219 + $0x8] sm:$0xff]
      %vm227 = vcmask 523264
      %228 = vst.msk [vmem:[#allocation2] sm:$0xff] %vm227, 0.0
      %229 = vst.msk [vmem:[#allocation2 + $0x8] sm:$0xff] %vm227, 0.0
      %vm230 = vcmask 517120
      %231 = vst.msk [vmem:[#allocation2 + $0x10] sm:$0x3] %vm230, 0.0
      %v232 = vmax.f32 %v225, 0.0
      %v233 = vmax.f32 %v226, 0.0
      %234 = vst.msk [vmem:[#allocation2 + $0x1] sm:$0xff] %vm227, %v232
      %235 = vst.msk [vmem:[#allocation2 + $0x9] sm:$0xff] %vm227, %v233
      %v236 = vld [vmem:[%s2] sm:$0x1]
      %v238 = vlaneseq
      %v239 = vshrl.u32 %v238, 7
      %v240 = vsub.s32 0, %v239
      %v241 = vrot.slane %v236, %v240
      %v243 = vld [vmem:[#allocation2] sm:$0xff]
      %v244 = vld [vmem:[#allocation2 + $0x8] sm:$0xff]
      %v245 = vld [vmem:[%s1] sm:$0xff]
      %v246 = vld [vmem:[%s1 + $0x8] sm:$0xff]
      %v247 = vld [vmem:[%s1 + $0x10] sm:$0xff]
      %v248 = vld [vmem:[%s1 + $0x18] sm:$0xff]
      %v249 = vld [vmem:[%s1 + $0x20] sm:$0xff]
      %v250 = vld [vmem:[%s1 + $0x28] sm:$0xff]
      %v251 = vld [vmem:[%s1 + $0x30] sm:$0xff]
      %v252 = vld [vmem:[%s1 + $0x38] sm:$0xff]
      %v254 = vsel %vm227, %v243, 0
      %v257 = vsel %vm227, %v244, 0
      %259 = vmatprep.subr.mxu0 0.0
      %260 = vmatpush1.msra.mxu0 0.0
      %261 = vmatprep.subr.mxu0 0.0
      %262 = vmatpush1.msra.mxu0 0.0
      %263 = vmatprep.subr.mxu0 0.0
      %264 = vmatpush1.msra.mxu0 0.0
      %265 = vmatprep.subr.mxu0 0.0
      %266 = vmatpush1.msra.mxu0 0.0
      %267 = vmatprep.subr.mxu0 0.0
      %268 = vmatpush1.msra.mxu0 0.0
      %269 = vmatprep.subr.mxu0 0.0
      %270 = vmatpush1.msra.mxu0 0.0
      %271 = vmatprep.subr.mxu0 0.0
      %272 = vmatpush1.msra.mxu0 0.0
      %273 = vmatprep.subr.mxu0 0.0
      %274 = vmatpush1.msra.mxu0 0.0
      %275 = vmatprep.subr.mxu0 0.0
      %276 = vmatpush1.msra.mxu0 %v252
      %277 = vmatprep.subr.mxu0 0.0
      %278 = vmatpush1.msra.mxu0 %v251
      %279 = vmatprep.subr.mxu0 0.0
      %280 = vmatpush1.msra.mxu0 %v250
      %281 = vmatprep.subr.mxu0 0.0
      %282 = vmatpush1.msra.mxu0 %v249
      %283 = vmatprep.subr.mxu0 0.0
      %284 = vmatpush1.msra.mxu0 %v248
      %285 = vmatprep.subr.mxu0 0.0
      %286 = vmatpush1.msra.mxu0 %v247
      %287 = vmatprep.subr.mxu0 0.0
      %288 = vmatpush1.msra.mxu0 %v246
      %289 = vmatprep.subr.mxu0 0.0
      %290 = vmatpush1.msra.mxu0 %v245
      %291 = vmatprep.subr.mxu0 0.0
      %292 = vmatpush2.msra.mxu0 0.0
      %293 = vmatprep.subr.mxu0 0.0
      %294 = vmatpush2.msra.mxu0 0.0
      %295 = vmatprep.subr.mxu0 0.0
      %296 = vmatpush2.msra.mxu0 0.0
      %297 = vmatprep.subr.mxu0 0.0
      %298 = vmatpush2.msra.mxu0 0.0
      %299 = vmatprep.subr.mxu0 0.0
      %300 = vmatpush2.msra.mxu0 0.0
      %301 = vmatprep.subr.mxu0 0.0
      %302 = vmatpush2.msra.mxu0 0.0
      %303 = vmatprep.subr.mxu0 0.0
      %304 = vmatpush2.msra.mxu0 0.0
      %305 = vmatprep.subr.mxu0 0.0
      %306 = vmatpush2.msra.mxu0 0.0
      %307 = vmatprep.subr.mxu0 0.0
      %308 = vmatpush2.msra.mxu0 0.0
      %309 = vmatprep.subr.mxu0 0.0
      %310 = vmatpush2.msra.mxu0 0.0
      %311 = vmatprep.subr.mxu0 0.0
      %312 = vmatpush2.msra.mxu0 0.0
      %313 = vmatprep.subr.mxu0 0.0
      %314 = vmatpush2.msra.mxu0 0.0
      %315 = vmatprep.subr.mxu0 0.0
      %316 = vmatpush2.msra.mxu0 0.0
      %317 = vmatprep.subr.mxu0 0.0
      %318 = vmatpush2.msra.mxu0 0.0
      %319 = vmatprep.subr.mxu0 0.0
      %320 = vmatpush2.msra.mxu0 0.0
      %321 = vmatprep.subr.mxu0 0.0
      %322 = vmatpush2.msra.mxu0 0.0
      %323 = vmatprep.mubr.f32.mxu0 0.0
      %324 = vmatmul.mubr.f32.gmra.mxu0 %v254
      %v325 = vpop.f32.mrf.mxu0
      %v326 = vadd.f32 0.0, %v325
      %v327 = vpop.f32.mrf.mxu0
      %328 = vmatprep.mubr.f32.mxu0 0.0
      %329 = vmatmul.mubr.f32.gmra.mxu0 %v257
      %v330 = vpop.f32.mrf.mxu0
      %v331 = vadd.f32 0.0, %v330
      %v332 = vpop.f32.mrf.mxu0
      %333 = vdwg.mxu0
      %v334 = vadd.f32 %v241, %v326
      %v335 = vadd.f32 %v241, %v331
      %v336 = vld [vmem:[#allocation2 + $0x1] sm:$0xff]
      %v337 = vld [vmem:[#allocation2 + $0x9] sm:$0xff]
      %s338 = scalar_lea.vmem %s1, 64
      %v339 = vld [vmem:[%s338] sm:$0xff]
      %v340 = vld [vmem:[%s338 + $0x8] sm:$0xff]
      %v341 = vld [vmem:[%s338 + $0x10] sm:$0xff]
      %v342 = vld [vmem:[%s338 + $0x18] sm:$0xff]
      %v343 = vld [vmem:[%s338 + $0x20] sm:$0xff]
      %v344 = vld [vmem:[%s338 + $0x28] sm:$0xff]
      %v345 = vld [vmem:[%s338 + $0x30] sm:$0xff]
      %v346 = vld [vmem:[%s338 + $0x38] sm:$0xff]
      %v348 = vsel %vm227, %v336, 0
      %v351 = vsel %vm227, %v337, 0
      %353 = vmatprep.subr.mxu0 0.0
      %354 = vmatpush1.msra.mxu0 0.0
      %355 = vmatprep.subr.mxu0 0.0
      %356 = vmatpush1.msra.mxu0 0.0
      %357 = vmatprep.subr.mxu0 0.0
      %358 = vmatpush1.msra.mxu0 0.0
      %359 = vmatprep.subr.mxu0 0.0
      %360 = vmatpush1.msra.mxu0 0.0
      %361 = vmatprep.subr.mxu0 0.0
      %362 = vmatpush1.msra.mxu0 0.0
      %363 = vmatprep.subr.mxu0 0.0
      %364 = vmatpush1.msra.mxu0 0.0
      %365 = vmatprep.subr.mxu0 0.0
      %366 = vmatpush1.msra.mxu0 0.0
      %367 = vmatprep.subr.mxu0 0.0
      %368 = vmatpush1.msra.mxu0 0.0
      %369 = vmatprep.subr.mxu0 0.0
      %370 = vmatpush1.msra.mxu0 %v346
      %371 = vmatprep.subr.mxu0 0.0
      %372 = vmatpush1.msra.mxu0 %v345
      %373 = vmatprep.subr.mxu0 0.0
      %374 = vmatpush1.msra.mxu0 %v344
      %375 = vmatprep.subr.mxu0 0.0
      %376 = vmatpush1.msra.mxu0 %v343
      %377 = vmatprep.subr.mxu0 0.0
      %378 = vmatpush1.msra.mxu0 %v342
      %379 = vmatprep.subr.mxu0 0.0
      %380 = vmatpush1.msra.mxu0 %v341
      %381 = vmatprep.subr.mxu0 0.0
      %382 = vmatpush1.msra.mxu0 %v340
      %383 = vmatprep.subr.mxu0 0.0
      %384 = vmatpush1.msra.mxu0 %v339
      %385 = vmatprep.subr.mxu0 0.0
      %386 = vmatpush2.msra.mxu0 0.0
      %387 = vmatprep.subr.mxu0 0.0
      %388 = vmatpush2.msra.mxu0 0.0
      %389 = vmatprep.subr.mxu0 0.0
      %390 = vmatpush2.msra.mxu0 0.0
      %391 = vmatprep.subr.mxu0 0.0
      %392 = vmatpush2.msra.mxu0 0.0
      %393 = vmatprep.subr.mxu0 0.0
      %394 = vmatpush2.msra.mxu0 0.0
      %395 = vmatprep.subr.mxu0 0.0
      %396 = vmatpush2.msra.mxu0 0.0
      %397 = vmatprep.subr.mxu0 0.0
      %398 = vmatpush2.msra.mxu0 0.0
      %399 = vmatprep.subr.mxu0 0.0
      %400 = vmatpush2.msra.mxu0 0.0
      %401 = vmatprep.subr.mxu0 0.0
      %402 = vmatpush2.msra.mxu0 0.0
      %403 = vmatprep.subr.mxu0 0.0
      %404 = vmatpush2.msra.mxu0 0.0
      %405 = vmatprep.subr.mxu0 0.0
      %406 = vmatpush2.msra.mxu0 0.0
      %407 = vmatprep.subr.mxu0 0.0
      %408 = vmatpush2.msra.mxu0 0.0
      %409 = vmatprep.subr.mxu0 0.0
      %410 = vmatpush2.msra.mxu0 0.0
      %411 = vmatprep.subr.mxu0 0.0
      %412 = vmatpush2.msra.mxu0 0.0
      %413 = vmatprep.subr.mxu0 0.0
      %414 = vmatpush2.msra.mxu0 0.0
      %415 = vmatprep.subr.mxu0 0.0
      %416 = vmatpush2.msra.mxu0 0.0
      %417 = vmatprep.mubr.f32.mxu0 0.0
      %418 = vmatmul.mubr.f32.gmra.mxu0 %v348
      %v419 = vpop.f32.mrf.mxu0
      %v420 = vadd.f32 0.0, %v419
      %v421 = vpop.f32.mrf.mxu0
      %422 = vmatprep.mubr.f32.mxu0 0.0
      %423 = vmatmul.mubr.f32.gmra.mxu0 %v351
      %v424 = vpop.f32.mrf.mxu0
      %v425 = vadd.f32 0.0, %v424
      %v426 = vpop.f32.mrf.mxu0
      %427 = vdwg.mxu0
      %v428 = vadd.f32 %v334, %v420
      %v429 = vadd.f32 %v335, %v425
      %v430 = vld [vmem:[#allocation2 + $0x2] sm:$0xff]
      %v431 = vld [vmem:[#allocation2 + $0xa] sm:$0xff]
      %s432 = scalar_lea.vmem %s1, 128
      %v433 = vld [vmem:[%s432] sm:$0xff]
      %v434 = vld [vmem:[%s432 + $0x8] sm:$0xff]
      %v435 = vld [vmem:[%s432 + $0x10] sm:$0xff]
      %v436 = vld [vmem:[%s432 + $0x18] sm:$0xff]
      %v437 = vld [vmem:[%s432 + $0x20] sm:$0xff]
      %v438 = vld [vmem:[%s432 + $0x28] sm:$0xff]
      %v439 = vld [vmem:[%s432 + $0x30] sm:$0xff]
      %v440 = vld [vmem:[%s432 + $0x38] sm:$0xff]
      %v442 = vsel %vm227, %v430, 0
      %v445 = vsel %vm227, %v431, 0
      %447 = vmatprep.subr.mxu0 0.0
      %448 = vmatpush1.msra.mxu0 0.0
      %449 = vmatprep.subr.mxu0 0.0
      %450 = vmatpush1.msra.mxu0 0.0
      %451 = vmatprep.subr.mxu0 0.0
      %452 = vmatpush1.msra.mxu0 0.0
      %453 = vmatprep.subr.mxu0 0.0
      %454 = vmatpush1.msra.mxu0 0.0
      %455 = vmatprep.subr.mxu0 0.0
      %456 = vmatpush1.msra.mxu0 0.0
      %457 = vmatprep.subr.mxu0 0.0
      %458 = vmatpush1.msra.mxu0 0.0
      %459 = vmatprep.subr.mxu0 0.0
      %460 = vmatpush1.msra.mxu0 0.0
      %461 = vmatprep.subr.mxu0 0.0
      %462 = vmatpush1.msra.mxu0 0.0
      %463 = vmatprep.subr.mxu0 0.0
      %464 = vmatpush1.msra.mxu0 %v440
      %465 = vmatprep.subr.mxu0 0.0
      %466 = vmatpush1.msra.mxu0 %v439
      %467 = vmatprep.subr.mxu0 0.0
      %468 = vmatpush1.msra.mxu0 %v438
      %469 = vmatprep.subr.mxu0 0.0
      %470 = vmatpush1.msra.mxu0 %v437
      %471 = vmatprep.subr.mxu0 0.0
      %472 = vmatpush1.msra.mxu0 %v436
      %473 = vmatprep.subr.mxu0 0.0
      %474 = vmatpush1.msra.mxu0 %v435
      %475 = vmatprep.subr.mxu0 0.0
      %476 = vmatpush1.msra.mxu0 %v434
      %477 = vmatprep.subr.mxu0 0.0
      %478 = vmatpush1.msra.mxu0 %v433
      %479 = vmatprep.subr.mxu0 0.0
      %480 = vmatpush2.msra.mxu0 0.0
      %481 = vmatprep.subr.mxu0 0.0
      %482 = vmatpush2.msra.mxu0 0.0
      %483 = vmatprep.subr.mxu0 0.0
      %484 = vmatpush2.msra.mxu0 0.0
      %485 = vmatprep.subr.mxu0 0.0
      %486 = vmatpush2.msra.mxu0 0.0
      %487 = vmatprep.subr.mxu0 0.0
      %488 = vmatpush2.msra.mxu0 0.0
      %489 = vmatprep.subr.mxu0 0.0
      %490 = vmatpush2.msra.mxu0 0.0
      %491 = vmatprep.subr.mxu0 0.0
      %492 = vmatpush2.msra.mxu0 0.0
      %493 = vmatprep.subr.mxu0 0.0
      %494 = vmatpush2.msra.mxu0 0.0
      %495 = vmatprep.subr.mxu0 0.0
      %496 = vmatpush2.msra.mxu0 0.0
      %497 = vmatprep.subr.mxu0 0.0
      %498 = vmatpush2.msra.mxu0 0.0
      %499 = vmatprep.subr.mxu0 0.0
      %500 = vmatpush2.msra.mxu0 0.0
      %501 = vmatprep.subr.mxu0 0.0
      %502 = vmatpush2.msra.mxu0 0.0
      %503 = vmatprep.subr.mxu0 0.0
      %504 = vmatpush2.msra.mxu0 0.0
      %505 = vmatprep.subr.mxu0 0.0
      %506 = vmatpush2.msra.mxu0 0.0
      %507 = vmatprep.subr.mxu0 0.0
      %508 = vmatpush2.msra.mxu0 0.0
      %509 = vmatprep.subr.mxu0 0.0
      %510 = vmatpush2.msra.mxu0 0.0
      %511 = vmatprep.mubr.f32.mxu0 0.0
      %512 = vmatmul.mubr.f32.gmra.mxu0 %v442
      %v513 = vpop.f32.mrf.mxu0
      %v514 = vadd.f32 0.0, %v513
      %v515 = vpop.f32.mrf.mxu0
      %516 = vmatprep.mubr.f32.mxu0 0.0
      %517 = vmatmul.mubr.f32.gmra.mxu0 %v445
      %v518 = vpop.f32.mrf.mxu0
      %v519 = vadd.f32 0.0, %v518
      %v520 = vpop.f32.mrf.mxu0
      %521 = vdwg.mxu0
      %v522 = vadd.f32 %v428, %v514
      %v523 = vadd.f32 %v429, %v519
      %524 = vst [vmem:[#allocation3] sm:$0xff] 0.0
      %525 = vst [vmem:[#allocation3 + $0x8] sm:$0xff] 0.0
      %526 = vst [vmem:[#allocation3 + $0x10] sm:$0x3] 0.0
      %v527 = vmax.f32 %v522, 0.0
      %v528 = vmax.f32 %v523, 0.0
      %529 = vst [vmem:[#allocation3 + $0x1] sm:$0xff] %v527
      %530 = vst [vmem:[#allocation3 + $0x9] sm:$0xff] %v528
      %v531 = vld [vmem:[%s4] sm:$0x1]
      %v533 = vlaneseq
      %v534 = vshrl.u32 %v533, 7
      %v535 = vsub.s32 0, %v534
      %v536 = vrot.slane %v531, %v535
      %v538 = vld [vmem:[#allocation3] sm:$0xff]
      %v539 = vld [vmem:[#allocation3 + $0x8] sm:$0xff]
      %v540 = vld [vmem:[%s3] sm:$0xff]
      %v541 = vld [vmem:[%s3 + $0x8] sm:$0xff]
      %v542 = vld [vmem:[%s3 + $0x10] sm:$0xff]
      %v543 = vld [vmem:[%s3 + $0x18] sm:$0xff]
      %v544 = vld [vmem:[%s3 + $0x20] sm:$0xff]
      %v545 = vld [vmem:[%s3 + $0x28] sm:$0xff]
      %v546 = vld [vmem:[%s3 + $0x30] sm:$0xff]
      %v547 = vld [vmem:[%s3 + $0x38] sm:$0xff]
      %v548 = vld [vmem:[%s3 + $0x40] sm:$0xff]
      %v549 = vld [vmem:[%s3 + $0x48] sm:$0xff]
      %v550 = vld [vmem:[%s3 + $0x50] sm:$0xff]
      %v551 = vld [vmem:[%s3 + $0x58] sm:$0xff]
      %v552 = vld [vmem:[%s3 + $0x60] sm:$0xff]
      %v553 = vld [vmem:[%s3 + $0x68] sm:$0xff]
      %v554 = vld [vmem:[%s3 + $0x70] sm:$0xff]
      %v555 = vld [vmem:[%s3 + $0x78] sm:$0xff]
      %556 = vmatprep.subr.mxu0 0.0
      %557 = vmatpush1.msra.mxu0 %v555
      %558 = vmatprep.subr.mxu0 0.0
      %559 = vmatpush1.msra.mxu0 %v554
      %560 = vmatprep.subr.mxu0 0.0
      %561 = vmatpush1.msra.mxu0 %v553
      %562 = vmatprep.subr.mxu0 0.0
      %563 = vmatpush1.msra.mxu0 %v552
      %564 = vmatprep.subr.mxu0 0.0
      %565 = vmatpush1.msra.mxu0 %v551
      %566 = vmatprep.subr.mxu0 0.0
      %567 = vmatpush1.msra.mxu0 %v550
      %568 = vmatprep.subr.mxu0 0.0
      %569 = vmatpush1.msra.mxu0 %v549
      %570 = vmatprep.subr.mxu0 0.0
      %571 = vmatpush1.msra.mxu0 %v548
      %572 = vmatprep.subr.mxu0 0.0
      %573 = vmatpush1.msra.mxu0 %v547
      %574 = vmatprep.subr.mxu0 0.0
      %575 = vmatpush1.msra.mxu0 %v546
      %576 = vmatprep.subr.mxu0 0.0
      %577 = vmatpush1.msra.mxu0 %v545
      %578 = vmatprep.subr.mxu0 0.0
      %579 = vmatpush1.msra.mxu0 %v544
      %580 = vmatprep.subr.mxu0 0.0
      %581 = vmatpush1.msra.mxu0 %v543
      %582 = vmatprep.subr.mxu0 0.0
      %583 = vmatpush1.msra.mxu0 %v542
      %584 = vmatprep.subr.mxu0 0.0
      %585 = vmatpush1.msra.mxu0 %v541
      %586 = vmatprep.subr.mxu0 0.0
      %587 = vmatpush1.msra.mxu0 %v540
      %588 = vmatprep.subr.mxu0 0.0
      %589 = vmatpush2.msra.mxu0 0.0
      %590 = vmatprep.subr.mxu0 0.0
      %591 = vmatpush2.msra.mxu0 0.0
      %592 = vmatprep.subr.mxu0 0.0
      %593 = vmatpush2.msra.mxu0 0.0
      %594 = vmatprep.subr.mxu0 0.0
      %595 = vmatpush2.msra.mxu0 0.0
      %596 = vmatprep.subr.mxu0 0.0
      %597 = vmatpush2.msra.mxu0 0.0
      %598 = vmatprep.subr.mxu0 0.0
      %599 = vmatpush2.msra.mxu0 0.0
      %600 = vmatprep.subr.mxu0 0.0
      %601 = vmatpush2.msra.mxu0 0.0
      %602 = vmatprep.subr.mxu0 0.0
      %603 = vmatpush2.msra.mxu0 0.0
      %604 = vmatprep.subr.mxu0 0.0
      %605 = vmatpush2.msra.mxu0 0.0
      %606 = vmatprep.subr.mxu0 0.0
      %607 = vmatpush2.msra.mxu0 0.0
      %608 = vmatprep.subr.mxu0 0.0
      %609 = vmatpush2.msra.mxu0 0.0
      %610 = vmatprep.subr.mxu0 0.0
      %611 = vmatpush2.msra.mxu0 0.0
      %612 = vmatprep.subr.mxu0 0.0
      %613 = vmatpush2.msra.mxu0 0.0
      %614 = vmatprep.subr.mxu0 0.0
      %615 = vmatpush2.msra.mxu0 0.0
      %616 = vmatprep.subr.mxu0 0.0
      %617 = vmatpush2.msra.mxu0 0.0
      %618 = vmatprep.subr.mxu0 0.0
      %619 = vmatpush2.msra.mxu0 0.0
      %620 = vmatprep.mubr.f32.mxu0 0.0
      %621 = vmatmul.mubr.f32.gmra.mxu0 %v538
      %v622 = vpop.f32.mrf.mxu0
      %v623 = vadd.f32 0.0, %v622
      %v624 = vpop.f32.mrf.mxu0
      %625 = vmatprep.mubr.f32.mxu0 0.0
      %626 = vmatmul.mubr.f32.gmra.mxu0 %v539
      %v627 = vpop.f32.mrf.mxu0
      %v628 = vadd.f32 0.0, %v627
      %v629 = vpop.f32.mrf.mxu0
      %630 = vdwg.mxu0
      %v631 = vadd.f32 %v536, %v623
      %v632 = vadd.f32 %v536, %v628
      %v633 = vld [vmem:[#allocation3 + $0x1] sm:$0xff]
      %v634 = vld [vmem:[#allocation3 + $0x9] sm:$0xff]
      %s635 = scalar_lea.vmem %s3, 128
      %v636 = vld [vmem:[%s635] sm:$0xff]
      %v637 = vld [vmem:[%s635 + $0x8] sm:$0xff]
      %v638 = vld [vmem:[%s635 + $0x10] sm:$0xff]
      %v639 = vld [vmem:[%s635 + $0x18] sm:$0xff]
      %v640 = vld [vmem:[%s635 + $0x20] sm:$0xff]
      %v641 = vld [vmem:[%s635 + $0x28] sm:$0xff]
      %v642 = vld [vmem:[%s635 + $0x30] sm:$0xff]
      %v643 = vld [vmem:[%s635 + $0x38] sm:$0xff]
      %v644 = vld [vmem:[%s635 + $0x40] sm:$0xff]
      %v645 = vld [vmem:[%s635 + $0x48] sm:$0xff]
      %v646 = vld [vmem:[%s635 + $0x50] sm:$0xff]
      %v647 = vld [vmem:[%s635 + $0x58] sm:$0xff]
      %v648 = vld [vmem:[%s635 + $0x60] sm:$0xff]
      %v649 = vld [vmem:[%s635 + $0x68] sm:$0xff]
      %v650 = vld [vmem:[%s635 + $0x70] sm:$0xff]
      %v651 = vld [vmem:[%s635 + $0x78] sm:$0xff]
      %652 = vmatprep.subr.mxu0 0.0
      %653 = vmatpush1.msra.mxu0 %v651
      %654 = vmatprep.subr.mxu0 0.0
      %655 = vmatpush1.msra.mxu0 %v650
      %656 = vmatprep.subr.mxu0 0.0
      %657 = vmatpush1.msra.mxu0 %v649
      %658 = vmatprep.subr.mxu0 0.0
      %659 = vmatpush1.msra.mxu0 %v648
      %660 = vmatprep.subr.mxu0 0.0
      %661 = vmatpush1.msra.mxu0 %v647
      %662 = vmatprep.subr.mxu0 0.0
      %663 = vmatpush1.msra.mxu0 %v646
      %664 = vmatprep.subr.mxu0 0.0
      %665 = vmatpush1.msra.mxu0 %v645
      %666 = vmatprep.subr.mxu0 0.0
      %667 = vmatpush1.msra.mxu0 %v644
      %668 = vmatprep.subr.mxu0 0.0
      %669 = vmatpush1.msra.mxu0 %v643
      %670 = vmatprep.subr.mxu0 0.0
      %671 = vmatpush1.msra.mxu0 %v642
      %672 = vmatprep.subr.mxu0 0.0
      %673 = vmatpush1.msra.mxu0 %v641
      %674 = vmatprep.subr.mxu0 0.0
      %675 = vmatpush1.msra.mxu0 %v640
      %676 = vmatprep.subr.mxu0 0.0
      %677 = vmatpush1.msra.mxu0 %v639
      %678 = vmatprep.subr.mxu0 0.0
      %679 = vmatpush1.msra.mxu0 %v638
      %680 = vmatprep.subr.mxu0 0.0
      %681 = vmatpush1.msra.mxu0 %v637
      %682 = vmatprep.subr.mxu0 0.0
      %683 = vmatpush1.msra.mxu0 %v636
      %684 = vmatprep.subr.mxu0 0.0
      %685 = vmatpush2.msra.mxu0 0.0
      %686 = vmatprep.subr.mxu0 0.0
      %687 = vmatpush2.msra.mxu0 0.0
      %688 = vmatprep.subr.mxu0 0.0
      %689 = vmatpush2.msra.mxu0 0.0
      %690 = vmatprep.subr.mxu0 0.0
      %691 = vmatpush2.msra.mxu0 0.0
      %692 = vmatprep.subr.mxu0 0.0
      %693 = vmatpush2.msra.mxu0 0.0
      %694 = vmatprep.subr.mxu0 0.0
      %695 = vmatpush2.msra.mxu0 0.0
      %696 = vmatprep.subr.mxu0 0.0
      %697 = vmatpush2.msra.mxu0 0.0
      %698 = vmatprep.subr.mxu0 0.0
      %699 = vmatpush2.msra.mxu0 0.0
      %700 = vmatprep.subr.mxu0 0.0
      %701 = vmatpush2.msra.mxu0 0.0
      %702 = vmatprep.subr.mxu0 0.0
      %703 = vmatpush2.msra.mxu0 0.0
      %704 = vmatprep.subr.mxu0 0.0
      %705 = vmatpush2.msra.mxu0 0.0
      %706 = vmatprep.subr.mxu0 0.0
      %707 = vmatpush2.msra.mxu0 0.0
      %708 = vmatprep.subr.mxu0 0.0
      %709 = vmatpush2.msra.mxu0 0.0
      %710 = vmatprep.subr.mxu0 0.0
      %711 = vmatpush2.msra.mxu0 0.0
      %712 = vmatprep.subr.mxu0 0.0
      %713 = vmatpush2.msra.mxu0 0.0
      %714 = vmatprep.subr.mxu0 0.0
      %715 = vmatpush2.msra.mxu0 0.0
      %716 = vmatprep.mubr.f32.mxu0 0.0
      %717 = vmatmul.mubr.f32.gmra.mxu0 %v633
      %v718 = vpop.f32.mrf.mxu0
      %v719 = vadd.f32 0.0, %v718
      %v720 = vpop.f32.mrf.mxu0
      %721 = vmatprep.mubr.f32.mxu0 0.0
      %722 = vmatmul.mubr.f32.gmra.mxu0 %v634
      %v723 = vpop.f32.mrf.mxu0
      %v724 = vadd.f32 0.0, %v723
      %v725 = vpop.f32.mrf.mxu0
      %726 = vdwg.mxu0
      %v727 = vadd.f32 %v631, %v719
      %v728 = vadd.f32 %v632, %v724
      %v729 = vld [vmem:[#allocation3 + $0x2] sm:$0xff]
      %v730 = vld [vmem:[#allocation3 + $0xa] sm:$0xff]
      %s731 = scalar_lea.vmem %s3, 256
      %v732 = vld [vmem:[%s731] sm:$0xff]
      %v733 = vld [vmem:[%s731 + $0x8] sm:$0xff]
      %v734 = vld [vmem:[%s731 + $0x10] sm:$0xff]
      %v735 = vld [vmem:[%s731 + $0x18] sm:$0xff]
      %v736 = vld [vmem:[%s731 + $0x20] sm:$0xff]
      %v737 = vld [vmem:[%s731 + $0x28] sm:$0xff]
      %v738 = vld [vmem:[%s731 + $0x30] sm:$0xff]
      %v739 = vld [vmem:[%s731 + $0x38] sm:$0xff]
      %v740 = vld [vmem:[%s731 + $0x40] sm:$0xff]
      %v741 = vld [vmem:[%s731 + $0x48] sm:$0xff]
      %v742 = vld [vmem:[%s731 + $0x50] sm:$0xff]
      %v743 = vld [vmem:[%s731 + $0x58] sm:$0xff]
      %v744 = vld [vmem:[%s731 + $0x60] sm:$0xff]
      %v745 = vld [vmem:[%s731 + $0x68] sm:$0xff]
      %v746 = vld [vmem:[%s731 + $0x70] sm:$0xff]
      %v747 = vld [vmem:[%s731 + $0x78] sm:$0xff]
      %748 = vmatprep.subr.mxu0 0.0
      %749 = vmatpush1.msra.mxu0 %v747
      %750 = vmatprep.subr.mxu0 0.0
      %751 = vmatpush1.msra.mxu0 %v746
      %752 = vmatprep.subr.mxu0 0.0
      %753 = vmatpush1.msra.mxu0 %v745
      %754 = vmatprep.subr.mxu0 0.0
      %755 = vmatpush1.msra.mxu0 %v744
      %756 = vmatprep.subr.mxu0 0.0
      %757 = vmatpush1.msra.mxu0 %v743
      %758 = vmatprep.subr.mxu0 0.0
      %759 = vmatpush1.msra.mxu0 %v742
      %760 = vmatprep.subr.mxu0 0.0
      %761 = vmatpush1.msra.mxu0 %v741
      %762 = vmatprep.subr.mxu0 0.0
      %763 = vmatpush1.msra.mxu0 %v740
      %764 = vmatprep.subr.mxu0 0.0
      %765 = vmatpush1.msra.mxu0 %v739
      %766 = vmatprep.subr.mxu0 0.0
      %767 = vmatpush1.msra.mxu0 %v738
      %768 = vmatprep.subr.mxu0 0.0
      %769 = vmatpush1.msra.mxu0 %v737
      %770 = vmatprep.subr.mxu0 0.0
      %771 = vmatpush1.msra.mxu0 %v736
      %772 = vmatprep.subr.mxu0 0.0
      %773 = vmatpush1.msra.mxu0 %v735
      %774 = vmatprep.subr.mxu0 0.0
      %775 = vmatpush1.msra.mxu0 %v734
      %776 = vmatprep.subr.mxu0 0.0
      %777 = vmatpush1.msra.mxu0 %v733
      %778 = vmatprep.subr.mxu0 0.0
      %779 = vmatpush1.msra.mxu0 %v732
      %780 = vmatprep.subr.mxu0 0.0
      %781 = vmatpush2.msra.mxu0 0.0
      %782 = vmatprep.subr.mxu0 0.0
      %783 = vmatpush2.msra.mxu0 0.0
      %784 = vmatprep.subr.mxu0 0.0
      %785 = vmatpush2.msra.mxu0 0.0
      %786 = vmatprep.subr.mxu0 0.0
      %787 = vmatpush2.msra.mxu0 0.0
      %788 = vmatprep.subr.mxu0 0.0
      %789 = vmatpush2.msra.mxu0 0.0
      %790 = vmatprep.subr.mxu0 0.0
      %791 = vmatpush2.msra.mxu0 0.0
      %792 = vmatprep.subr.mxu0 0.0
      %793 = vmatpush2.msra.mxu0 0.0
      %794 = vmatprep.subr.mxu0 0.0
      %795 = vmatpush2.msra.mxu0 0.0
      %796 = vmatprep.subr.mxu0 0.0
      %797 = vmatpush2.msra.mxu0 0.0
      %798 = vmatprep.subr.mxu0 0.0
      %799 = vmatpush2.msra.mxu0 0.0
      %800 = vmatprep.subr.mxu0 0.0
      %801 = vmatpush2.msra.mxu0 0.0
      %802 = vmatprep.subr.mxu0 0.0
      %803 = vmatpush2.msra.mxu0 0.0
      %804 = vmatprep.subr.mxu0 0.0
      %805 = vmatpush2.msra.mxu0 0.0
      %806 = vmatprep.subr.mxu0 0.0
      %807 = vmatpush2.msra.mxu0 0.0
      %808 = vmatprep.subr.mxu0 0.0
      %809 = vmatpush2.msra.mxu0 0.0
      %810 = vmatprep.subr.mxu0 0.0
      %811 = vmatpush2.msra.mxu0 0.0
      %812 = vmatprep.mubr.f32.mxu0 0.0
      %813 = vmatmul.mubr.f32.gmra.mxu0 %v729
      %v814 = vpop.f32.mrf.mxu0
      %v815 = vadd.f32 0.0, %v814
      %v816 = vpop.f32.mrf.mxu0
      %817 = vmatprep.mubr.f32.mxu0 0.0
      %818 = vmatmul.mubr.f32.gmra.mxu0 %v730
      %v819 = vpop.f32.mrf.mxu0
      %v820 = vadd.f32 0.0, %v819
      %v821 = vpop.f32.mrf.mxu0
      %822 = vdwg.mxu0
      %v823 = vadd.f32 %v727, %v815
      %v824 = vadd.f32 %v728, %v820
      %825 = vst [vmem:[%s224] sm:$0xff] %v823
      %826 = vst [vmem:[%s224 + $0x8] sm:$0xff] %v824
      %p827 = scmp.lt.s32.totalorder %s16, 1
      %s828 = scalar_select %p827, %s16, 1
      %s829 = smul.addr %s828, 2
      %s830 = smul.addr %s829, 8
      %s831 = scalar_lea.vmem %s5, %s830
      // Predicated region
      $region41: #{cnn_forward.1} parent=39 // pred_check
        %p832 = pneg %p144
      $region42: #{cnn_forward.1} parent=39 // pred_check_branch
        %834 = sbr.rel (%p832) target = $region44
      $region43: #{cnn_forward.1} parent=39 // pred_region
        _
      $region44: #{cnn_forward.1} parent=39 // pred_fallthru
        _
    $region40: #{cnn_forward.1} parent=5 // pred_fallthru
      _
    %p835 = scmp.le.s32.totalorder 2, %s11
    // Predicated region
    $region45: #{cnn_forward.1} parent=5 // pred_check
      %p836 = pneg %p835
    $region46: #{cnn_forward.1} parent=5 // pred_check_branch
      %838 = sbr.rel (%p836) target = $region48
    $region47: #{cnn_forward.1} parent=5 // pred_region
      %s839 = ssub.s32 %s11, 2
      // Predicated region
      $region49: #{cnn_forward.1} parent=47 // pred_check
        %p840 = pneg %p150
      $region50: #{cnn_forward.1} parent=47 // pred_check_branch
        %842 = sbr.rel (%p840) target = $region52
      $region51: #{cnn_forward.1} parent=47 // pred_region
        %p843 = scmp.lt.s32.totalorder %s17, 1
        %s844 = scalar_select %p843, %s17, 1
        %s845 = smul.addr %s844, 2
        %s846 = smul.addr %s845, 8
        %s847 = scalar_lea.vmem %s5, %s846
      $region52: #{cnn_forward.1} parent=47 // pred_fallthru
        _
    $region48: #{cnn_forward.1} parent=5 // pred_fallthru
      _
  $region6: #{cnn_forward.1} parent=0 // loop_footer
    %s15 = sadd.s32 1, %s11
  $region7: #{cnn_forward.1} parent=0 // loop_footer_branch
    %10 = sbr.rel target = $region3
  $region8: #{cnn_forward.1} parent=0 // loop_exit
    _

</llo_original>
